<compile_context>
chip_gen: v7x
topology: tpu7x:2x2x1
jax: 0.10.0
libtpu: 0.0.40
codegen_flags: <defaults>
</compile_context>

<pallas_src>
import jax
import jax.numpy as jnp
from jax.experimental import pallas as pl
from jax.experimental.pallas import tpu as pltpu


# Packed parameter blob layout (f32, shape (24, 32)):
#   rows  0:16, cols 0:4   : W1 (10,4)  zero-padded to (16,4)
#   rows  0:16, col  4     : b1 (10,)   zero-padded to (16,1)
#   rows  0:16, cols 8:24  : W2 (10,10) zero-padded to (16,16)
#   rows  0:16, col  24    : b2 (10,)   zero-padded to (16,1)
#   rows 16:24, cols 0:16  : W3 (3,10)  zero-padded to (8,16)
#   rows 16:24, col  16    : b3 (3,)    zero-padded to (8,1)
_P_ROWS, _P_COLS = 24, 32


def _round_up(n, m):
    return ((n + m - 1) // m) * m


def classifier_kernel(x_ref, p_ref, o_ref):
    x = x_ref[...]                                   # (4, TB), batch on lanes

    w1 = p_ref[0:16, 0:4]                            # (16, 4)
    b1 = p_ref[0:16, 4:5]                            # (16, 1)
    w2 = p_ref[0:16, 8:24]                           # (16, 16)
    b2 = p_ref[0:16, 24:25]                          # (16, 1)
    w3 = p_ref[16:24, 0:16]                          # (8, 16)
    b3 = p_ref[16:24, 16:17]                         # (8, 1)

    # fc1 + ReLU    (padded rows 10..15 stay exactly 0)
    h1 = jnp.maximum(
        jnp.dot(w1, x, preferred_element_type=jnp.float32) + b1, 0.0)    # (16, TB)
    # fc2 + ReLU
    h2 = jnp.maximum(
        jnp.dot(w2, h1, preferred_element_type=jnp.float32) + b2, 0.0)   # (16, TB)
    # fc3 (rows 3..7 are zero padding, never read)
    logits = jnp.dot(w3, h2, preferred_element_type=jnp.float32) + b3    # (8, TB)

    # log_softmax over the 3 real logit rows: pure elementwise across sublanes
    # (no XLU reduction); exp/log handled by the EUP.
    l0 = logits[0:1, :]
    l1 = logits[1:2, :]
    l2 = logits[2:3, :]
    m = jnp.maximum(jnp.maximum(l0, l1), l2)
    s0, s1, s2 = l0 - m, l1 - m, l2 - m
    lse = jnp.log(jnp.exp(s0) + jnp.exp(s1) + jnp.exp(s2))
    o_ref[...] = jnp.concatenate([s0 - lse, s1 - lse, s2 - lse], axis=0)  # (3, TB)


def classifier_forward(x, params_blob, *, tb=2048):
    """x: (B, 4) float32. params_blob: (24, 32) packed params. Returns (B, 3)."""
    B = x.shape[0]
    # Batch tile: lane multiple of 128, no larger than the (padded) batch.
    tb = _round_up(max(int(tb), 128), 128)
    tb = min(tb, _round_up(max(B, 1), 128))
    b_pad = _round_up(B, tb)

    # Layout plumbing in the wrapper: batch goes to the lane axis, zero-pad it.
    xt = jnp.zeros((4, b_pad), jnp.float32).at[:, :B].set(x.T.astype(jnp.float32))

    out_t = pl.pallas_call(
        classifier_kernel,
        out_shape=jax.ShapeDtypeStruct((3, b_pad), jnp.float32),
        grid=(b_pad // tb,),
        in_specs=[
            pl.BlockSpec((4, tb), lambda i: (0, i)),             # activations, tiled on batch
            pl.BlockSpec((_P_ROWS, _P_COLS), lambda i: (0, 0)),  # packed params, resident
        ],
        out_specs=pl.BlockSpec((3, tb), lambda i: (0, i)),
        compiler_params=pltpu.CompilerParams(
            dimension_semantics=("parallel",),
        ),
    )(xt, params_blob)

    return out_t[:, :B].T                              # back to PyTorch (B, 3)


def init_params(key):
    """Deterministic synthetic parameters in PyTorch nn.Linear convention:
    W has shape (out_features, in_features), b has shape (out_features,)."""
    k1, k2, k3, k4, k5, k6 = jax.random.split(key, 6)
    s1 = 1.0 / jnp.sqrt(4.0)
    s2 = 1.0 / jnp.sqrt(10.0)
    return {
        "w1": jax.random.uniform(k1, (10, 4), jnp.float32, -s1, s1),
        "b1": jax.random.uniform(k2, (10,), jnp.float32, -s1, s1),
        "w2": jax.random.uniform(k3, (10, 10), jnp.float32, -s2, s2),
        "b2": jax.random.uniform(k4, (10,), jnp.float32, -s2, s2),
        "w3": jax.random.uniform(k5, (3, 10), jnp.float32, -s2, s2),
        "b3": jax.random.uniform(k6, (3,), jnp.float32, -s2, s2),
    }


def pack_params(params):
    """Pack all weights/biases into one zero-padded (24, 32) f32 blob."""
    P = jnp.zeros((_P_ROWS, _P_COLS), jnp.float32)
    P = P.at[0:10, 0:4].set(params["w1"])
    P = P.at[0:10, 4].set(params["b1"])
    P = P.at[0:10, 8:18].set(params["w2"])
    P = P.at[0:10, 24].set(params["b2"])
    P = P.at[16:19, 0:10].set(params["w3"])
    P = P.at[16:19, 16].set(params["b3"])
    return P


def reference_forward(x, params):
    """Plain-JAX reference mirroring the PyTorch forward."""
    h1 = jax.nn.relu(x @ params["w1"].T + params["b1"])
    h2 = jax.nn.relu(h1 @ params["w2"].T + params["b2"])
    logits = h2 @ params["w3"].T + params["b3"]
    return jax.nn.log_softmax(logits, axis=1)


if __name__ == "__main__":
    key = jax.random.PRNGKey(0)
    kx, kx2, kp = jax.random.split(key, 3)

    params = init_params(kp)
    blob = pack_params(params)

    # Small batch (single grid step).
    B = 8
    x = jax.random.normal(kx, (B, 4), jnp.float32)
    out = jax.block_until_ready(classifier_forward(x, blob))
    ref = reference_forward(x, params)
    assert out.shape == (B, 3)
    assert jnp.allclose(out, ref, atol=1e-5, rtol=1e-5)

    # Non-multiple batch with an explicit small tile -> multi-step parallel grid
    # (exercises padding, batch tiling and the parallel dimension semantics).
    B2 = 260
    x2 = jax.random.normal(kx2, (B2, 4), jnp.float32)
    out2 = jax.block_until_ready(classifier_forward(x2, blob, tb=128))
    ref2 = reference_forward(x2, params)
    assert out2.shape == (B2, 3)
    assert jnp.allclose(out2, ref2, atol=1e-5, rtol=1e-5)

    print("KERNEL_OK")
</pallas_src>

<mosaic_0001>
module attributes {stable_mosaic.version = 11 : i64} {
  func.func @classifier_kernel(%arg0: i32, %arg1: memref<4x128xf32, #tpu.memory_space<vmem>>, %arg2: memref<24x32xf32, #tpu.memory_space<vmem>>, %arg3: memref<3x128xf32, #tpu.memory_space<vmem>>) attributes {dimension_semantics = [#tpu.dimension_semantics<parallel>], iteration_bounds = array<i64: 1>, scalar_prefetch = 0 : i64, scratch_operands = 0 : i64, tpu.core_type = #tpu.core_type<tc>, window_params = [{transform_indices = @transform_0, window_bounds = array<i64: 4, 128>}, {pipeline_mode = #tpu.pipeline_mode<synchronous>, transform_indices = @transform_1, window_bounds = array<i64: 24, 32>}, {transform_indices = @transform_2, window_bounds = array<i64: 3, 128>}]} {
    %c0 = arith.constant 0 : index
    %c0_0 = arith.constant 0 : index
    %0 = vector.load %arg1[%c0, %c0_0] : memref<4x128xf32, #tpu.memory_space<vmem>>, vector<4x128xf32>
    %c0_1 = arith.constant 0 : index
    %c0_2 = arith.constant 0 : index
    %1 = vector.load %arg2[%c0_1, %c0_2] : memref<24x32xf32, #tpu.memory_space<vmem>>, vector<16x4xf32>
    %c0_3 = arith.constant 0 : index
    %c4 = arith.constant 4 : index
    %2 = vector.load %arg2[%c0_3, %c4] : memref<24x32xf32, #tpu.memory_space<vmem>>, vector<16x1xf32>
    %c0_4 = arith.constant 0 : index
    %c8 = arith.constant 8 : index
    %3 = vector.load %arg2[%c0_4, %c8] : memref<24x32xf32, #tpu.memory_space<vmem>>, vector<16x16xf32>
    %c0_5 = arith.constant 0 : index
    %c24 = arith.constant 24 : index
    %4 = vector.load %arg2[%c0_5, %c24] : memref<24x32xf32, #tpu.memory_space<vmem>>, vector<16x1xf32>
    %c16 = arith.constant 16 : index
    %c0_6 = arith.constant 0 : index
    %5 = vector.load %arg2[%c16, %c0_6] : memref<24x32xf32, #tpu.memory_space<vmem>>, vector<8x16xf32>
    %c16_7 = arith.constant 16 : index
    %c16_8 = arith.constant 16 : index
    %6 = vector.load %arg2[%c16_7, %c16_8] : memref<24x32xf32, #tpu.memory_space<vmem>>, vector<8x1xf32>
    %cst = arith.constant dense<0.000000e+00> : vector<16x128xf32>
    %7 = tpu.matmul %1, %0, %cst {dimension_numbers = #tpu.dot_dimension_numbers<[1], [0], [0], [1], [0, 0, 1, 1], [], []>} : vector<16x4xf32>, vector<4x128xf32>, vector<16x128xf32> -> vector<16x128xf32>
    %8 = vector.broadcast %2 : vector<16x1xf32> to vector<16x128xf32>
    %9 = arith.addf %7, %8 : vector<16x128xf32>
    %cst_9 = arith.constant 0.000000e+00 : f32
    %10 = vector.broadcast %cst_9 : f32 to vector<16x128xf32>
    %11 = arith.maximumf %9, %10 : vector<16x128xf32>
    %cst_10 = arith.constant dense<0.000000e+00> : vector<16x128xf32>
    %12 = tpu.matmul %3, %11, %cst_10 {dimension_numbers = #tpu.dot_dimension_numbers<[1], [0], [0], [1], [0, 0, 1, 1], [], []>} : vector<16x16xf32>, vector<16x128xf32>, vector<16x128xf32> -> vector<16x128xf32>
    %13 = vector.broadcast %4 : vector<16x1xf32> to vector<16x128xf32>
    %14 = arith.addf %12, %13 : vector<16x128xf32>
    %cst_11 = arith.constant 0.000000e+00 : f32
    %15 = vector.broadcast %cst_11 : f32 to vector<16x128xf32>
    %16 = arith.maximumf %14, %15 : vector<16x128xf32>
    %cst_12 = arith.constant dense<0.000000e+00> : vector<8x128xf32>
    %17 = tpu.matmul %5, %16, %cst_12 {dimension_numbers = #tpu.dot_dimension_numbers<[1], [0], [0], [1], [0, 0, 1, 1], [], []>} : vector<8x16xf32>, vector<16x128xf32>, vector<8x128xf32> -> vector<8x128xf32>
    %18 = vector.broadcast %6 : vector<8x1xf32> to vector<8x128xf32>
    %19 = arith.addf %17, %18 : vector<8x128xf32>
    %20 = vector.extract_strided_slice %19 {offsets = [0, 0], sizes = [1, 128], strides = [1, 1]} : vector<8x128xf32> to vector<1x128xf32>
    %21 = vector.extract_strided_slice %19 {offsets = [1, 0], sizes = [1, 128], strides = [1, 1]} : vector<8x128xf32> to vector<1x128xf32>
    %22 = vector.extract_strided_slice %19 {offsets = [2, 0], sizes = [1, 128], strides = [1, 1]} : vector<8x128xf32> to vector<1x128xf32>
    %23 = arith.maximumf %20, %21 : vector<1x128xf32>
    %24 = arith.maximumf %23, %22 : vector<1x128xf32>
    %25 = arith.subf %20, %24 : vector<1x128xf32>
    %26 = arith.subf %21, %24 : vector<1x128xf32>
    %27 = arith.subf %22, %24 : vector<1x128xf32>
    %28 = math.exp %25 : vector<1x128xf32>
    %29 = math.exp %26 : vector<1x128xf32>
    %30 = arith.addf %28, %29 : vector<1x128xf32>
    %31 = math.exp %27 : vector<1x128xf32>
    %32 = arith.addf %30, %31 : vector<1x128xf32>
    %33 = math.log %32 : vector<1x128xf32>
    %34 = arith.subf %25, %33 : vector<1x128xf32>
    %35 = arith.subf %26, %33 : vector<1x128xf32>
    %36 = arith.subf %27, %33 : vector<1x128xf32>
    %37 = tpu.concatenate %34, %35, %36 in 0 : vector<1x128xf32>, vector<1x128xf32>, vector<1x128xf32> -> vector<3x128xf32>
    %c0_13 = arith.constant 0 : index
    %c0_14 = arith.constant 0 : index
    %38 = vector.load %arg3[%c0_13, %c0_14] : memref<3x128xf32, #tpu.memory_space<vmem>>, vector<3x128xf32>
    tpu.vector_store %arg3[%c0_13, %c0_14], %37 {strides = array<i32>} : memref<3x128xf32, #tpu.memory_space<vmem>>, vector<3x128xf32>,
    return
  }
  func.func @transform_0(%arg0: i32) -> (i32, i32) {
    %c0_i32 = arith.constant 0 : i32
    %c0_i32_0 = arith.constant 0 : i32
    return %c0_i32, %arg0 : i32, i32
  }
  func.func @transform_1(%arg0: i32) -> (i32, i32) {
    %c0_i32 = arith.constant 0 : i32
    %c0_i32_0 = arith.constant 0 : i32
    %c0_i32_1 = arith.constant 0 : i32
    return %c0_i32, %c0_i32_0 : i32, i32
  }
  func.func @transform_2(%arg0: i32) -> (i32, i32) {
    %c0_i32 = arith.constant 0 : i32
    %c0_i32_0 = arith.constant 0 : i32
    return %c0_i32, %arg0 : i32, i32
  }
}

</mosaic_0001>

<llo_original>
// kernel: tpu_custom_call.1
$region0: #{tpu_custom_call.1}
  #allocation0 [shape = 'u32[]', space=smem, size = 0x4, offset = 0x4, fixed_abs, tag = 'smem constant byte address 0x4 - core index']
  #allocation1 [shape = 'u32[144,128]{1,0:T(1,128)}', space=vmem, size = 0x12000, scoped, tag = 'internal scratch']
  %s0 = inlined_call_operand.hbm [shape: f32[4,128], index: 0, kind: input, shape index: {}]
  %s1 = inlined_call_operand.hbm [shape: f32[24,32], index: 1, kind: input, shape index: {}]
  %s2 = inlined_call_operand.hbm [shape: f32[3,128], index: 2, kind: output, shape index: {}]
  %s3 = sld [smem:[#allocation0]]
  $region26: #{tpu_custom_call.1} parent=0
    _
  %s5 = ssub.s32 1, %s3
  %s6 = scalar_select 0, %s5, %s3
  $region1: #{tpu_custom_call.1} parent=0
    #allocation2 [shape = 'u8[2048]{0}', space=vmem, size = 0x800, scoped, tag = 'input window, operand 0, single buffered']
    #allocation3 [shape = 's32[1]{0}', space=sflag, size = 0x4, scoped, tag = 'scoped memory for tpu_custom_call.1']
    #allocation4 [shape = 's32[1]{0}', space=sflag, size = 0x4, scoped, tag = 'scoped memory for tpu_custom_call.1']
    #allocation5 [shape = 'u8[12288]{0}', space=vmem, size = 0x3000, scoped, tag = 'input window, operand 1, single buffered']
    #allocation6 [shape = 's32[1]{0}', space=sflag, size = 0x4, scoped, tag = 'scoped memory for tpu_custom_call.1']
    #allocation7 [shape = 'u8[2048]{0}', space=vmem, size = 0x800, scoped, tag = 'output window, operand 0, single buffered']
    %7 = vsyncpa [#allocation3], 0
    %8 = vsyncpa [#allocation6], 0
    %9 = vsyncpa [#allocation4], 0
    // Predicated region
    $region2: #{tpu_custom_call.1} parent=1 // pred_check
      _
    $region3: #{tpu_custom_call.1} parent=1 // pred_check_branch
      %11 = sbr.rel (0) target = $region5
    $region4: #{tpu_custom_call.1} parent=1 // pred_region
      %s13 = ssub.s32 64, 64
      %14 = vsyncadd [#allocation3], %s13
      %s16 = sshll.u32 [#allocation2], 4
      %s17 = int_to_ptr.vmem [resolvable:$true] %s16
      %19 = dma.hbm_to_vmem [thread:$0]  %s0, 64, %s17, [#allocation3]
    $region5: #{tpu_custom_call.1} parent=1 // pred_fallthru
      _
    // Predicated region
    $region6: #{tpu_custom_call.1} parent=1 // pred_check
      _
    $region7: #{tpu_custom_call.1} parent=1 // pred_check_branch
      %21 = sbr.rel (0) target = $region9
    $region8: #{tpu_custom_call.1} parent=1 // pred_region
      %s23 = ssub.s32 384, 384
      %24 = vsyncadd [#allocation6], %s23
      %s25 = sshll.u32 [#allocation5], 4
      %s26 = int_to_ptr.vmem [resolvable:$true] %s25
      %31 = dma.hbm_to_vmem [thread:$0]  %s1, 384, %s26, [#allocation6], 128, 128, 8
    $region9: #{tpu_custom_call.1} parent=1 // pred_fallthru
      _
    // Predicated region
    $region10: #{tpu_custom_call.1} parent=1 // pred_check
      _
    $region11: #{tpu_custom_call.1} parent=1 // pred_check_branch
      %33 = sbr.rel (0) target = $region13
    $region12: #{tpu_custom_call.1} parent=1 // pred_region
      %34 = dma.done [#allocation3], 64
    $region13: #{tpu_custom_call.1} parent=1 // pred_fallthru
      _
    // Predicated region
    $region14: #{tpu_custom_call.1} parent=1 // pred_check
      _
    $region15: #{tpu_custom_call.1} parent=1 // pred_check_branch
      %36 = sbr.rel (0) target = $region17
    $region16: #{tpu_custom_call.1} parent=1 // pred_region
      %37 = dma.done [#allocation6], 384
    $region17: #{tpu_custom_call.1} parent=1 // pred_fallthru
      _
    %v38 = vld [vmem:[#allocation2] sm:$0xf]
    %v39 = vld [vmem:[#allocation5] sm:$0xff]
    %v40 = vld [vmem:[#allocation5 + $0x8] sm:$0xff]
    %v41 = vld [vmem:[#allocation5 + $0x10] sm:$0xff]
    %43 = vset.pattern.permute.xlu0 4
    %44 = vperm.xlu0 %43, %v39
    %v45 = vpop.permute.xlu0 %44
    %48 = vset.pattern.permute.xlu0 4
    %49 = vperm.xlu0 %48, %v40
    %v50 = vpop.permute.xlu0 %49
    %vm52 = vcmask 31744
    %v53 = vsel %vm52, %v39, 0
    %v55 = vsel %vm52, %v40, 0
    %vm57 = vcmask 1043456
    %v59 = vsel %vm57, %v38, 0
    %61 = vmatprep.subr.mxu0 0.0
    %62 = vmatpush1.msra.mxu0 %v59
    %63 = vmatprep.subr.mxu0 0.0
    %64 = vmatpush1.msra.mxu0 0.0
    %65 = vmatprep.subr.mxu0 0.0
    %66 = vmatpush1.msra.mxu0 0.0
    %67 = vmatprep.subr.mxu0 0.0
    %68 = vmatpush1.msra.mxu0 0.0
    %69 = vmatprep.subr.mxu0 0.0
    %70 = vmatpush1.msra.mxu0 0.0
    %71 = vmatprep.subr.mxu0 0.0
    %72 = vmatpush1.msra.mxu0 0.0
    %73 = vmatprep.subr.mxu0 0.0
    %74 = vmatpush1.msra.mxu0 0.0
    %75 = vmatprep.subr.mxu0 0.0
    %76 = vmatpush1.msra.mxu0 0.0
    %77 = vmatprep.subr.mxu0 0.0
    %78 = vmatpush1.msra.mxu0 0.0
    %79 = vmatprep.subr.mxu0 0.0
    %80 = vmatpush1.msra.mxu0 0.0
    %81 = vmatprep.subr.mxu0 0.0
    %82 = vmatpush1.msra.mxu0 0.0
    %83 = vmatprep.subr.mxu0 0.0
    %84 = vmatpush1.msra.mxu0 0.0
    %85 = vmatprep.subr.mxu0 0.0
    %86 = vmatpush1.msra.mxu0 0.0
    %87 = vmatprep.subr.mxu0 0.0
    %88 = vmatpush1.msra.mxu0 0.0
    %89 = vmatprep.subr.mxu0 0.0
    %90 = vmatpush1.msra.mxu0 0.0
    %91 = vmatprep.subr.mxu0 0.0
    %92 = vmatpush1.msra.mxu0 0.0
    %93 = vmatprep.subr.mxu0 0.0
    %94 = vmatpush1.msra.mxu0 0.0
    %95 = vmatprep.subr.mxu0 0.0
    %96 = vmatpush1.msra.mxu0 0.0
    %97 = vmatprep.subr.mxu0 0.0
    %98 = vmatpush1.msra.mxu0 0.0
    %99 = vmatprep.subr.mxu0 0.0
    %100 = vmatpush1.msra.mxu0 0.0
    %101 = vmatprep.subr.mxu0 0.0
    %102 = vmatpush1.msra.mxu0 0.0
    %103 = vmatprep.subr.mxu0 0.0
    %104 = vmatpush1.msra.mxu0 0.0
    %105 = vmatprep.subr.mxu0 0.0
    %106 = vmatpush1.msra.mxu0 0.0
    %107 = vmatprep.subr.mxu0 0.0
    %108 = vmatpush1.msra.mxu0 0.0
    %109 = vmatprep.subr.mxu0 0.0
    %110 = vmatpush1.msra.mxu0 0.0
    %111 = vmatprep.subr.mxu0 0.0
    %112 = vmatpush1.msra.mxu0 0.0
    %113 = vmatprep.subr.mxu0 0.0
    %114 = vmatpush1.msra.mxu0 0.0
    %115 = vmatprep.subr.mxu0 0.0
    %116 = vmatpush1.msra.mxu0 0.0
    %117 = vmatprep.subr.mxu0 0.0
    %118 = vmatpush1.msra.mxu0 0.0
    %119 = vmatprep.subr.mxu0 0.0
    %120 = vmatpush1.msra.mxu0 0.0
    %121 = vmatprep.subr.mxu0 0.0
    %122 = vmatpush1.msra.mxu0 0.0
    %123 = vmatprep.subr.mxu0 0.0
    %124 = vmatpush1.msra.mxu0 0.0
    %125 = vmatprep.mubr.f32.mxu0 0.0
    %126 = vmatmul.mubr.f32.gmra.mrb[0].mxu0 %v53
    %v127 = vpop.f32.mrb[0].mxu0
    %v128 = vadd.f32 %v45, %v127
    %v129 = vpop.f32.mrb[0].mxu0
    %130 = vmatprep.mubr.f32.mxu0 0.0
    %131 = vmatmul.mubr.f32.gmra.mrb[0].mxu0 %v55
    %v132 = vpop.f32.mrb[0].mxu0
    %v133 = vadd.f32 %v50, %v132
    %v134 = vpop.f32.mrb[0].mxu0
    %135 = vdwg.mxu0
    %v136 = vmax.f32 %v128, 0.0
    %v137 = vmax.f32 %v133, 0.0
    %138 = vset.pattern.permute.xlu0 24
    %139 = vperm.xlu0 %138, %v39
    %v140 = vpop.permute.xlu0 %139
    %142 = vset.pattern.permute.xlu0 24
    %143 = vperm.xlu0 %142, %v40
    %v144 = vpop.permute.xlu0 %143
    %146 = vrot.lane.b32.xlu0 %v39, 120
    %v147 = vpop.permute.xlu0 %146
    %148 = vrot.lane.b32.xlu0 %v40, 120
    %v149 = vpop.permute.xlu0 %148
    %vm150 = vcmask 130048
    %v151 = vsel %vm150, %v147, 0
    %v153 = vsel %vm150, %v149, 0
    %155 = vmatprep.subr.mxu0 0.0
    %156 = vmatpush1.msra.mxu0 %v136
    %157 = vmatprep.subr.mxu0 0.0
    %158 = vmatpush1.msra.mxu0 %v137
    %159 = vmatprep.subr.mxu0 0.0
    %160 = vmatpush1.msra.mxu0 0.0
    %161 = vmatprep.subr.mxu0 0.0
    %162 = vmatpush1.msra.mxu0 0.0
    %163 = vmatprep.subr.mxu0 0.0
    %164 = vmatpush1.msra.mxu0 0.0
    %165 = vmatprep.subr.mxu0 0.0
    %166 = vmatpush1.msra.mxu0 0.0
    %167 = vmatprep.subr.mxu0 0.0
    %168 = vmatpush1.msra.mxu0 0.0
    %169 = vmatprep.subr.mxu0 0.0
    %170 = vmatpush1.msra.mxu0 0.0
    %171 = vmatprep.subr.mxu0 0.0
    %172 = vmatpush1.msra.mxu0 0.0
    %173 = vmatprep.subr.mxu0 0.0
    %174 = vmatpush1.msra.mxu0 0.0
    %175 = vmatprep.subr.mxu0 0.0
    %176 = vmatpush1.msra.mxu0 0.0
    %177 = vmatprep.subr.mxu0 0.0
    %178 = vmatpush1.msra.mxu0 0.0
    %179 = vmatprep.subr.mxu0 0.0
    %180 = vmatpush1.msra.mxu0 0.0
    %181 = vmatprep.subr.mxu0 0.0
    %182 = vmatpush1.msra.mxu0 0.0
    %183 = vmatprep.subr.mxu0 0.0
    %184 = vmatpush1.msra.mxu0 0.0
    %185 = vmatprep.subr.mxu0 0.0
    %186 = vmatpush1.msra.mxu0 0.0
    %187 = vmatprep.subr.mxu0 0.0
    %188 = vmatpush1.msra.mxu0 0.0
    %189 = vmatprep.subr.mxu0 0.0
    %190 = vmatpush1.msra.mxu0 0.0
    %191 = vmatprep.subr.mxu0 0.0
    %192 = vmatpush1.msra.mxu0 0.0
    %193 = vmatprep.subr.mxu0 0.0
    %194 = vmatpush1.msra.mxu0 0.0
    %195 = vmatprep.subr.mxu0 0.0
    %196 = vmatpush1.msra.mxu0 0.0
    %197 = vmatprep.subr.mxu0 0.0
    %198 = vmatpush1.msra.mxu0 0.0
    %199 = vmatprep.subr.mxu0 0.0
    %200 = vmatpush1.msra.mxu0 0.0
    %201 = vmatprep.subr.mxu0 0.0
    %202 = vmatpush1.msra.mxu0 0.0
    %203 = vmatprep.subr.mxu0 0.0
    %204 = vmatpush1.msra.mxu0 0.0
    %205 = vmatprep.subr.mxu0 0.0
    %206 = vmatpush1.msra.mxu0 0.0
    %207 = vmatprep.subr.mxu0 0.0
    %208 = vmatpush1.msra.mxu0 0.0
    %209 = vmatprep.subr.mxu0 0.0
    %210 = vmatpush1.msra.mxu0 0.0
    %211 = vmatprep.subr.mxu0 0.0
    %212 = vmatpush1.msra.mxu0 0.0
    %213 = vmatprep.subr.mxu0 0.0
    %214 = vmatpush1.msra.mxu0 0.0
    %215 = vmatprep.subr.mxu0 0.0
    %216 = vmatpush1.msra.mxu0 0.0
    %217 = vmatprep.subr.mxu0 0.0
    %218 = vmatpush1.msra.mxu0 0.0
    %219 = vmatprep.mubr.f32.mxu0 0.0
    %220 = vmatmul.mubr.f32.gmra.mrb[0].mxu0 %v151
    %v221 = vpop.f32.mrb[0].mxu0
    %v222 = vadd.f32 %v140, %v221
    %v223 = vpop.f32.mrb[0].mxu0
    %224 = vmatprep.mubr.f32.mxu0 0.0
    %225 = vmatmul.mubr.f32.gmra.mrb[0].mxu0 %v153
    %v226 = vpop.f32.mrb[0].mxu0
    %v227 = vadd.f32 %v144, %v226
    %v228 = vpop.f32.mrb[0].mxu0
    %229 = vdwg.mxu0
    %v230 = vmax.f32 %v222, 0.0
    %v231 = vmax.f32 %v227, 0.0
    %233 = vset.pattern.permute.xlu0 16
    %234 = vperm.xlu0 %233, %v41
    %v235 = vpop.permute.xlu0 %234
    %v237 = vsel %vm150, %v41, 0
    %239 = vmatprep.subr.mxu0 0.0
    %240 = vmatpush1.msra.mxu0 %v230
    %241 = vmatprep.subr.mxu0 0.0
    %242 = vmatpush1.msra.mxu0 %v231
    %243 = vmatprep.subr.mxu0 0.0
    %244 = vmatpush1.msra.mxu0 0.0
    %245 = vmatprep.subr.mxu0 0.0
    %246 = vmatpush1.msra.mxu0 0.0
    %247 = vmatprep.subr.mxu0 0.0
    %248 = vmatpush1.msra.mxu0 0.0
    %249 = vmatprep.subr.mxu0 0.0
    %250 = vmatpush1.msra.mxu0 0.0
    %251 = vmatprep.subr.mxu0 0.0
    %252 = vmatpush1.msra.mxu0 0.0
    %253 = vmatprep.subr.mxu0 0.0
    %254 = vmatpush1.msra.mxu0 0.0
    %255 = vmatprep.subr.mxu0 0.0
    %256 = vmatpush1.msra.mxu0 0.0
    %257 = vmatprep.subr.mxu0 0.0
    %258 = vmatpush1.msra.mxu0 0.0
    %259 = vmatprep.subr.mxu0 0.0
    %260 = vmatpush1.msra.mxu0 0.0
    %261 = vmatprep.subr.mxu0 0.0
    %262 = vmatpush1.msra.mxu0 0.0
    %263 = vmatprep.subr.mxu0 0.0
    %264 = vmatpush1.msra.mxu0 0.0
    %265 = vmatprep.subr.mxu0 0.0
    %266 = vmatpush1.msra.mxu0 0.0
    %267 = vmatprep.subr.mxu0 0.0
    %268 = vmatpush1.msra.mxu0 0.0
    %269 = vmatprep.subr.mxu0 0.0
    %270 = vmatpush1.msra.mxu0 0.0
    %271 = vmatprep.subr.mxu0 0.0
    %272 = vmatpush1.msra.mxu0 0.0
    %273 = vmatprep.subr.mxu0 0.0
    %274 = vmatpush1.msra.mxu0 0.0
    %275 = vmatprep.subr.mxu0 0.0
    %276 = vmatpush1.msra.mxu0 0.0
    %277 = vmatprep.subr.mxu0 0.0
    %278 = vmatpush1.msra.mxu0 0.0
    %279 = vmatprep.subr.mxu0 0.0
    %280 = vmatpush1.msra.mxu0 0.0
    %281 = vmatprep.subr.mxu0 0.0
    %282 = vmatpush1.msra.mxu0 0.0
    %283 = vmatprep.subr.mxu0 0.0
    %284 = vmatpush1.msra.mxu0 0.0
    %285 = vmatprep.subr.mxu0 0.0
    %286 = vmatpush1.msra.mxu0 0.0
    %287 = vmatprep.subr.mxu0 0.0
    %288 = vmatpush1.msra.mxu0 0.0
    %289 = vmatprep.subr.mxu0 0.0
    %290 = vmatpush1.msra.mxu0 0.0
    %291 = vmatprep.subr.mxu0 0.0
    %292 = vmatpush1.msra.mxu0 0.0
    %293 = vmatprep.subr.mxu0 0.0
    %294 = vmatpush1.msra.mxu0 0.0
    %295 = vmatprep.subr.mxu0 0.0
    %296 = vmatpush1.msra.mxu0 0.0
    %297 = vmatprep.subr.mxu0 0.0
    %298 = vmatpush1.msra.mxu0 0.0
    %299 = vmatprep.subr.mxu0 0.0
    %300 = vmatpush1.msra.mxu0 0.0
    %301 = vmatprep.subr.mxu0 0.0
    %302 = vmatpush1.msra.mxu0 0.0
    %303 = vmatprep.mubr.f32.mxu0 0.0
    %304 = vmatmul.mubr.f32.gmra.mrb[0].mxu0 %v237
    %v305 = vpop.f32.mrb[0].mxu0
    %v306 = vadd.f32 %v235, %v305
    %v307 = vpop.f32.mrb[0].mxu0
    %308 = vdwg.mxu0
    %v310 = vrot.slane %v306, 1
    %v312 = vmax.f32 %v306, %v310
    %v313 = vrot.slane %v306, 2
    %v315 = vmax.f32 %v312, %v313
    %v316 = vsub.f32 %v306, %v315
    %v318 = vrot.slane %v315, 7
    %v320 = vsub.f32 %v306, %v318
    %v321 = vrot.slane %v315, 6
    %v323 = vsub.f32 %v306, %v321
    %v324 = vmul.f32 %v316, 1.442695
    %v325 = vpow.pop %v324
    %v326 = vmul.f32 %v320, 1.442695
    %v327 = vpow.pop %v326
    %v329 = vrot.slane %v327, 1
    %v331 = vadd.f32 %v325, %v329
    %v332 = vmul.f32 %v323, 1.442695
    %v333 = vpow.pop %v332
    %v335 = vrot.slane %v333, 2
    %v337 = vadd.f32 %v331, %v335
    %v338 = vlog2.pop %v337
    %v339 = vmul.f32 %v338, 0.6931472
    %v340 = vsub.f32 %v316, %v339
    %v342 = vrot.slane %v339, 7
    %v344 = vsub.f32 %v320, %v342
    %v345 = vrot.slane %v339, 6
    %v347 = vsub.f32 %v323, %v345
    %vm348 = vcmask 1040384
    %v349 = vsel %vm348, %v340, %v344
    %vm350 = vcmask 1041408
    %v351 = vsel %vm350, %v349, %v347
    %352 = vst [vmem:[#allocation7] sm:$0x7] %v351
    // Predicated region
    $region18: #{tpu_custom_call.1} parent=1 // pred_check
      _
    $region19: #{tpu_custom_call.1} parent=1 // pred_check_branch
      %354 = sbr.rel (0) target = $region21
    $region20: #{tpu_custom_call.1} parent=1 // pred_region
      %s356 = ssub.s32 64, 64
      %357 = vsyncadd [#allocation4], %s356
      %s359 = sshll.u32 [#allocation7], 4
      %s360 = int_to_ptr.vmem [resolvable:$true] %s359
      %362 = dma.vmem_to_hbm [thread:$0]  %s360, 64, %s2, [#allocation4]
    $region21: #{tpu_custom_call.1} parent=1 // pred_fallthru
      _
    // Predicated region
    $region22: #{tpu_custom_call.1} parent=1 // pred_check
      _
    $region23: #{tpu_custom_call.1} parent=1 // pred_check_branch
      %364 = sbr.rel (0) target = $region25
    $region24: #{tpu_custom_call.1} parent=1 // pred_region
      %365 = dma.done [#allocation4], 64
    $region25: #{tpu_custom_call.1} parent=1 // pred_fallthru
      _
    %366 = vsyncpa [#allocation3], 1
    %367 = vsyncpa [#allocation6], 1
    %368 = vsyncpa [#allocation4], 1

</llo_original>
